<compile_context>
chip_gen: v5e
topology: v5e:2x2
jax: 0.10.0
libtpu: 0.0.40
codegen_flags: <defaults>
</compile_context>

<pallas_src>
import functools

import jax
import jax.numpy as jnp
from jax import lax
from jax.experimental import pallas as pl
from jax.experimental.pallas import tpu as pltpu


# Logical layer sizes and their sublane-padded versions.
F_IN, H1, H2, H3, F_OUT = 10, 16, 32, 16, 10
F_IN_PAD = 16    # 10 -> 16 (multiple of 8 sublanes)
F_OUT_PAD = 16   # 10 -> 16


def _round_up(n, m):
    return ((n + m - 1) // m) * m


def _mlp_kernel(x_ref,
                w1_ref, b1_ref,
                w2_ref, b2_ref,
                w3_ref, b3_ref,
                w4_ref, b4_ref,
                o_ref,
                *, chunk):
    """Fused MLP for one batch tile, feature-major layout (batch on lanes).

    x_ref : [16, TB]   padded input features x batch-tile
    wN_ref: [out_pad, in_pad]  (PyTorch [out, in] layout, zero-padded)
    bN_ref: [out_pad, 1]
    o_ref : [16, TB]

    The lane (batch) dimension is processed in `chunk`-wide register blocks so
    all intermediates stay in vregs.
    """
    # Hoist the (tiny) weights/biases into vregs once per tile; loop-invariant.
    w1 = w1_ref[...]; b1 = b1_ref[...]
    w2 = w2_ref[...]; b2 = b2_ref[...]
    w3 = w3_ref[...]; b3 = b3_ref[...]
    w4 = w4_ref[...]; b4 = b4_ref[...]

    n_chunks = x_ref.shape[1] // chunk

    def body(c, carry):
        off = pl.multiple_of(c * chunk, chunk)
        xb = x_ref[:, pl.ds(off, chunk)]                                  # [16, chunk]

        # Layer 1: Linear(10 -> 16) + ReLU. Padded x rows / padded W1 columns
        # are zero, so feature padding is a numerical no-op.
        h = jnp.dot(w1, xb, preferred_element_type=jnp.float32) + b1
        h = jnp.maximum(h, 0.0)                                           # [16, chunk]

        # Layer 2: Linear(16 -> 32) + ReLU
        h = jnp.dot(w2, h, preferred_element_type=jnp.float32) + b2
        h = jnp.maximum(h, 0.0)                                           # [32, chunk]

        # Layer 3: Linear(32 -> 16) + ReLU
        h = jnp.dot(w3, h, preferred_element_type=jnp.float32) + b3
        h = jnp.maximum(h, 0.0)                                           # [16, chunk]

        # Layer 4: Linear(16 -> 10), no activation (rows 10..15 of W4/b4 are 0).
        h = jnp.dot(w4, h, preferred_element_type=jnp.float32) + b4       # [16, chunk]

        o_ref[:, pl.ds(off, chunk)] = h.astype(o_ref.dtype)
        return carry

    lax.fori_loop(0, n_chunks, body, 0, unroll=(n_chunks <= 8))


def _pad_params(params):
    """Zero-pad PyTorch-layout [out, in] weights / [out] biases once (wrapper side)."""
    w1, b1 = params["l1"]   # (16, 10), (16,)
    w2, b2 = params["l2"]   # (32, 16), (32,)
    w3, b3 = params["l3"]   # (16, 32), (16,)
    w4, b4 = params["l4"]   # (10, 16), (10,)

    w1p = jnp.zeros((H1, F_IN_PAD), w1.dtype).at[:, :F_IN].set(w1)
    w4p = jnp.zeros((F_OUT_PAD, H3), w4.dtype).at[:F_OUT, :].set(w4)
    b4p = jnp.zeros((F_OUT_PAD,), b4.dtype).at[:F_OUT].set(b4)

    col = lambda b: b.reshape(-1, 1)   # [out, 1] broadcasts over the lane (batch) axis
    return (w1p, col(b1), w2, col(b2), w3, col(b3), w4p, col(b4p))


@functools.partial(jax.jit, static_argnames=("tb",))
def ttt_model_forward(x, params, tb=8192):
    """TttModel.forward. x: [B, 10] float32 -> [B, 10] float32."""
    B = x.shape[0]

    # --- Balanced batch tiles -------------------------------------------------
    # Pick the number of tiles first, then the (lane-aligned) tile size, so the
    # total padding is < 128 columns per tile instead of up to a full tile.
    n_tiles = max(1, pl.cdiv(B, tb))
    if B >= 512:
        # Keep at least 2 tiles so v7x megacore can shard the "parallel" grid
        # axis over both TensorCores (neutral on single-TC v5e/v6e).
        n_tiles = max(n_tiles, 2)
    TB = _round_up(pl.cdiv(B, n_tiles), 128)
    B_pad = n_tiles * TB

    # Lane chunk for in-kernel register blocking; must divide TB.
    chunk = next(c for c in (512, 256, 128) if TB % c == 0)

    w1p, b1c, w2p, b2c, w3p, b3c, w4p, b4c = _pad_params(params)

    # Feature-major, lane-dense input: batch on the last (lane) axis.
    # (Single fused XLA pad+transpose pass. TODO(synk): a feature-major [10, B]
    # caller interface or allow_input_fusion would eliminate this pass.)
    xT = jnp.zeros((F_IN_PAD, B_pad), x.dtype).at[:F_IN, :B].set(x.T)

    # Weights/biases: full-array blocks with a constant index map -> fetched once,
    # resident in VMEM across all batch tiles.
    const = lambda a: pl.BlockSpec(a.shape, lambda i: (0, 0))

    outT = pl.pallas_call(
        functools.partial(_mlp_kernel, chunk=chunk),
        out_shape=jax.ShapeDtypeStruct((F_OUT_PAD, B_pad), x.dtype),
        grid=(n_tiles,),
        in_specs=[pl.BlockSpec((F_IN_PAD, TB), lambda i: (0, i)),
                  const(w1p), const(b1c),
                  const(w2p), const(b2c),
                  const(w3p), const(b3c),
                  const(w4p), const(b4c)],
        out_specs=pl.BlockSpec((F_OUT_PAD, TB), lambda i: (0, i)),
        compiler_params=pltpu.CompilerParams(
            dimension_semantics=("parallel",)),
    )(xT, w1p, b1c, w2p, b2c, w3p, b3c, w4p, b4c)

    # Slice off feature padding and batch padding, back to [B, 10].
    return outT[:F_OUT, :B].T


def init_params(key):
    """PyTorch nn.Linear default init: W, b ~ U(-1/sqrt(fan_in), 1/sqrt(fan_in)).
    Weights stored PyTorch-style as [out, in]."""
    dims = [(10, 16), (16, 32), (32, 16), (16, 10)]  # (fan_in, fan_out)
    params = {}
    for i, (fan_in, fan_out) in enumerate(dims, start=1):
        key, kw, kb = jax.random.split(key, 3)
        bound = 1.0 / (fan_in ** 0.5)
        w = jax.random.uniform(kw, (fan_out, fan_in), jnp.float32, -bound, bound)
        b = jax.random.uniform(kb, (fan_out,), jnp.float32, -bound, bound)
        params[f"l{i}"] = (w, b)
    return params


def reference_forward(x, params):
    """Pure-JAX reference (PyTorch semantics: y = x @ W.T + b)."""
    h = x
    for i in range(1, 5):
        w, b = params[f"l{i}"]
        h = h @ w.T + b
        if i < 4:
            h = jnp.maximum(h, 0.0)
    return h


if __name__ == "__main__":
    key = jax.random.PRNGKey(0)
    key, kx1, kx2 = jax.random.split(key, 3)
    params = init_params(key)

    # Small batch: single tile, single register-block chunk.
    x_small = jax.random.normal(kx1, (8, 10), dtype=jnp.float32)
    out_small = jax.block_until_ready(ttt_model_forward(x_small, params))
    ref_small = reference_forward(x_small, params)
    assert out_small.shape == (8, 10)
    assert jnp.allclose(out_small, ref_small, atol=1e-5, rtol=1e-5), "mismatch (small)"

    # Larger batch, not a multiple of the tile size: exercises balanced tiling
    # (2 x 1280 tiles, ~2% padding), the pipelined multi-tile grid, and the
    # in-kernel chunked loop (5 x 256-lane chunks per tile).
    x_big = jax.random.normal(kx2, (2500, 10), dtype=jnp.float32)
    out_big = jax.block_until_ready(ttt_model_forward(x_big, params))
    ref_big = reference_forward(x_big, params)
    assert out_big.shape == (2500, 10)
    assert jnp.allclose(out_big, ref_big, atol=1e-5, rtol=1e-5), "mismatch (big)"

    print("KERNEL_OK")
</pallas_src>

<mosaic_0001>
module attributes {stable_mosaic.version = 11 : i64} {
  func.func @_mlp_kernel(%arg0: i32, %arg1: memref<16x128xf32, #tpu.memory_space<vmem>>, %arg2: memref<16x16xf32, #tpu.memory_space<vmem>>, %arg3: memref<16x1xf32, #tpu.memory_space<vmem>>, %arg4: memref<32x16xf32, #tpu.memory_space<vmem>>, %arg5: memref<32x1xf32, #tpu.memory_space<vmem>>, %arg6: memref<16x32xf32, #tpu.memory_space<vmem>>, %arg7: memref<16x1xf32, #tpu.memory_space<vmem>>, %arg8: memref<16x16xf32, #tpu.memory_space<vmem>>, %arg9: memref<16x1xf32, #tpu.memory_space<vmem>>, %arg10: memref<16x128xf32, #tpu.memory_space<vmem>>) attributes {dimension_semantics = [#tpu.dimension_semantics<parallel>], iteration_bounds = array<i64: 1>, scalar_prefetch = 0 : i64, scratch_operands = 0 : i64, tpu.core_type = #tpu.core_type<tc>, window_params = [{transform_indices = @transform_0, window_bounds = array<i64: 16, 128>}, {pipeline_mode = #tpu.pipeline_mode<synchronous>, transform_indices = @transform_1, window_bounds = array<i64: 16, 16>}, {pipeline_mode = #tpu.pipeline_mode<synchronous>, transform_indices = @transform_2, window_bounds = array<i64: 16, 1>}, {pipeline_mode = #tpu.pipeline_mode<synchronous>, transform_indices = @transform_3, window_bounds = array<i64: 32, 16>}, {pipeline_mode = #tpu.pipeline_mode<synchronous>, transform_indices = @transform_4, window_bounds = array<i64: 32, 1>}, {pipeline_mode = #tpu.pipeline_mode<synchronous>, transform_indices = @transform_5, window_bounds = array<i64: 16, 32>}, {pipeline_mode = #tpu.pipeline_mode<synchronous>, transform_indices = @transform_6, window_bounds = array<i64: 16, 1>}, {pipeline_mode = #tpu.pipeline_mode<synchronous>, transform_indices = @transform_7, window_bounds = array<i64: 16, 16>}, {pipeline_mode = #tpu.pipeline_mode<synchronous>, transform_indices = @transform_8, window_bounds = array<i64: 16, 1>}, {transform_indices = @transform_9, window_bounds = array<i64: 16, 128>}]} {
    %c0 = arith.constant 0 : index
    %c0_0 = arith.constant 0 : index
    %0 = vector.load %arg2[%c0, %c0_0] : memref<16x16xf32, #tpu.memory_space<vmem>>, vector<16x16xf32>
    %c0_1 = arith.constant 0 : index
    %c0_2 = arith.constant 0 : index
    %1 = vector.load %arg3[%c0_1, %c0_2] : memref<16x1xf32, #tpu.memory_space<vmem>>, vector<16x1xf32>
    %c0_3 = arith.constant 0 : index
    %c0_4 = arith.constant 0 : index
    %2 = vector.load %arg4[%c0_3, %c0_4] : memref<32x16xf32, #tpu.memory_space<vmem>>, vector<32x16xf32>
    %c0_5 = arith.constant 0 : index
    %c0_6 = arith.constant 0 : index
    %3 = vector.load %arg5[%c0_5, %c0_6] : memref<32x1xf32, #tpu.memory_space<vmem>>, vector<32x1xf32>
    %c0_7 = arith.constant 0 : index
    %c0_8 = arith.constant 0 : index
    %4 = vector.load %arg6[%c0_7, %c0_8] : memref<16x32xf32, #tpu.memory_space<vmem>>, vector<16x32xf32>
    %c0_9 = arith.constant 0 : index
    %c0_10 = arith.constant 0 : index
    %5 = vector.load %arg7[%c0_9, %c0_10] : memref<16x1xf32, #tpu.memory_space<vmem>>, vector<16x1xf32>
    %c0_11 = arith.constant 0 : index
    %c0_12 = arith.constant 0 : index
    %6 = vector.load %arg8[%c0_11, %c0_12] : memref<16x16xf32, #tpu.memory_space<vmem>>, vector<16x16xf32>
    %c0_13 = arith.constant 0 : index
    %c0_14 = arith.constant 0 : index
    %7 = vector.load %arg9[%c0_13, %c0_14] : memref<16x1xf32, #tpu.memory_space<vmem>>, vector<16x1xf32>
    %c0_i32 = arith.constant 0 : i32
    %c128_i32 = arith.constant 128 : i32
    %8 = arith.muli %c0_i32, %c128_i32 : i32
    %9 = tpu.assume_multiple %8, 128 : i32
    %c0_15 = arith.constant 0 : index
    %10 = arith.index_cast %9 : i32 to index
    %11 = vector.load %arg1[%c0_15, %10] : memref<16x128xf32, #tpu.memory_space<vmem>>, vector<16x128xf32>
    %cst = arith.constant dense<0.000000e+00> : vector<16x128xf32>
    %12 = tpu.matmul %0, %11, %cst {dimension_numbers = #tpu.dot_dimension_numbers<[1], [0], [0], [1], [0, 0, 1, 1], [], []>} : vector<16x16xf32>, vector<16x128xf32>, vector<16x128xf32> -> vector<16x128xf32>
    %13 = vector.broadcast %1 : vector<16x1xf32> to vector<16x128xf32>
    %14 = arith.addf %12, %13 : vector<16x128xf32>
    %cst_16 = arith.constant 0.000000e+00 : f32
    %15 = vector.broadcast %cst_16 : f32 to vector<16x128xf32>
    %16 = arith.maximumf %14, %15 : vector<16x128xf32>
    %cst_17 = arith.constant dense<0.000000e+00> : vector<32x128xf32>
    %17 = tpu.matmul %2, %16, %cst_17 {dimension_numbers = #tpu.dot_dimension_numbers<[1], [0], [0], [1], [0, 0, 1, 1], [], []>} : vector<32x16xf32>, vector<16x128xf32>, vector<32x128xf32> -> vector<32x128xf32>
    %18 = vector.broadcast %3 : vector<32x1xf32> to vector<32x128xf32>
    %19 = arith.addf %17, %18 : vector<32x128xf32>
    %cst_18 = arith.constant 0.000000e+00 : f32
    %20 = vector.broadcast %cst_18 : f32 to vector<32x128xf32>
    %21 = arith.maximumf %19, %20 : vector<32x128xf32>
    %cst_19 = arith.constant dense<0.000000e+00> : vector<16x128xf32>
    %22 = tpu.matmul %4, %21, %cst_19 {dimension_numbers = #tpu.dot_dimension_numbers<[1], [0], [0], [1], [0, 0, 1, 1], [], []>} : vector<16x32xf32>, vector<32x128xf32>, vector<16x128xf32> -> vector<16x128xf32>
    %23 = vector.broadcast %5 : vector<16x1xf32> to vector<16x128xf32>
    %24 = arith.addf %22, %23 : vector<16x128xf32>
    %cst_20 = arith.constant 0.000000e+00 : f32
    %25 = vector.broadcast %cst_20 : f32 to vector<16x128xf32>
    %26 = arith.maximumf %24, %25 : vector<16x128xf32>
    %cst_21 = arith.constant dense<0.000000e+00> : vector<16x128xf32>
    %27 = tpu.matmul %6, %26, %cst_21 {dimension_numbers = #tpu.dot_dimension_numbers<[1], [0], [0], [1], [0, 0, 1, 1], [], []>} : vector<16x16xf32>, vector<16x128xf32>, vector<16x128xf32> -> vector<16x128xf32>
    %28 = vector.broadcast %7 : vector<16x1xf32> to vector<16x128xf32>
    %29 = arith.addf %27, %28 : vector<16x128xf32>
    %c0_22 = arith.constant 0 : index
    %30 = arith.index_cast %9 : i32 to index
    %31 = vector.load %arg10[%c0_22, %30] : memref<16x128xf32, #tpu.memory_space<vmem>>, vector<16x128xf32>
    tpu.vector_store %arg10[%c0_22, %30], %29 {strides = array<i32>} : memref<16x128xf32, #tpu.memory_space<vmem>>, vector<16x128xf32>,
    %c1_i32 = arith.constant 1 : i32
    return
  }
  func.func @transform_0(%arg0: i32) -> (i32, i32) {
    %c0_i32 = arith.constant 0 : i32
    %c0_i32_0 = arith.constant 0 : i32
    return %c0_i32, %arg0 : i32, i32
  }
  func.func @transform_1(%arg0: i32) -> (i32, i32) {
    %c0_i32 = arith.constant 0 : i32
    %c0_i32_0 = arith.constant 0 : i32
    %c0_i32_1 = arith.constant 0 : i32
    return %c0_i32, %c0_i32_0 : i32, i32
  }
  func.func @transform_2(%arg0: i32) -> (i32, i32) {
    %c0_i32 = arith.constant 0 : i32
    %c0_i32_0 = arith.constant 0 : i32
    %c0_i32_1 = arith.constant 0 : i32
    return %c0_i32, %c0_i32_0 : i32, i32
  }
  func.func @transform_3(%arg0: i32) -> (i32, i32) {
    %c0_i32 = arith.constant 0 : i32
    %c0_i32_0 = arith.constant 0 : i32
    %c0_i32_1 = arith.constant 0 : i32
    return %c0_i32, %c0_i32_0 : i32, i32
  }
  func.func @transform_4(%arg0: i32) -> (i32, i32) {
    %c0_i32 = arith.constant 0 : i32
    %c0_i32_0 = arith.constant 0 : i32
    %c0_i32_1 = arith.constant 0 : i32
    return %c0_i32, %c0_i32_0 : i32, i32
  }
  func.func @transform_5(%arg0: i32) -> (i32, i32) {
    %c0_i32 = arith.constant 0 : i32
    %c0_i32_0 = arith.constant 0 : i32
    %c0_i32_1 = arith.constant 0 : i32
    return %c0_i32, %c0_i32_0 : i32, i32
  }
  func.func @transform_6(%arg0: i32) -> (i32, i32) {
    %c0_i32 = arith.constant 0 : i32
    %c0_i32_0 = arith.constant 0 : i32
    %c0_i32_1 = arith.constant 0 : i32
    return %c0_i32, %c0_i32_0 : i32, i32
  }
  func.func @transform_7(%arg0: i32) -> (i32, i32) {
    %c0_i32 = arith.constant 0 : i32
    %c0_i32_0 = arith.constant 0 : i32
    %c0_i32_1 = arith.constant 0 : i32
    return %c0_i32, %c0_i32_0 : i32, i32
  }
  func.func @transform_8(%arg0: i32) -> (i32, i32) {
    %c0_i32 = arith.constant 0 : i32
    %c0_i32_0 = arith.constant 0 : i32
    %c0_i32_1 = arith.constant 0 : i32
    return %c0_i32, %c0_i32_0 : i32, i32
  }
  func.func @transform_9(%arg0: i32) -> (i32, i32) {
    %c0_i32 = arith.constant 0 : i32
    %c0_i32_0 = arith.constant 0 : i32
    return %c0_i32, %arg0 : i32, i32
  }
}

</mosaic_0001>

<llo_original>
// kernel: ttt_model_forward.1
$region0: #{ttt_model_forward.1}
  #allocation0 [shape = 'u32[]', space=smem, size = 0x4, offset = 0x4, fixed_abs, tag = 'smem constant byte address 0x4 - core index']
  #allocation1 [shape = 'u32[72,128]{1,0:T(1,128)}', space=vmem, size = 0x9000, scoped, tag = 'internal scratch']
  %s0 = inlined_call_operand.vmem [shape: f32[16,128], index: 0, kind: input, shape index: {}]
  %s1 = inlined_call_operand.vmem [shape: f32[16,16], index: 1, kind: input, shape index: {}]
  %s2 = inlined_call_operand.vmem [shape: f32[16,1], index: 2, kind: input, shape index: {}]
  %s3 = inlined_call_operand.vmem [shape: f32[32,16], index: 3, kind: input, shape index: {}]
  %s4 = inlined_call_operand.vmem [shape: f32[32,1], index: 4, kind: input, shape index: {}]
  %s5 = inlined_call_operand.vmem [shape: f32[16,32], index: 5, kind: input, shape index: {}]
  %s6 = inlined_call_operand.vmem [shape: f32[16,1], index: 6, kind: input, shape index: {}]
  %s7 = inlined_call_operand.vmem [shape: f32[16,16], index: 7, kind: input, shape index: {}]
  %s8 = inlined_call_operand.vmem [shape: f32[16,1], index: 8, kind: input, shape index: {}]
  %s9 = inlined_call_operand.vmem [shape: f32[16,128], index: 9, kind: output, shape index: {}]
  %s10 = sld [smem:[#allocation0]]
  $region46: #{ttt_model_forward.1} parent=0
    _
  %s12 = ssub.s32 1, %s10
  %s13 = scalar_select 0, %s12, %s10
  // Predicated region
  $region2: #{ttt_model_forward.1} parent=0 // pred_check
    _
  $region3: #{ttt_model_forward.1} parent=0 // pred_check_branch
    %15 = sbr.rel (0) target = $region5
  $region4: #{ttt_model_forward.1} parent=0 // pred_region
    _
  $region5: #{ttt_model_forward.1} parent=0 // pred_fallthru
    _
  // Predicated region
  $region6: #{ttt_model_forward.1} parent=0 // pred_check
    _
  $region7: #{ttt_model_forward.1} parent=0 // pred_check_branch
    %17 = sbr.rel (0) target = $region9
  $region8: #{ttt_model_forward.1} parent=0 // pred_region
    _
  $region9: #{ttt_model_forward.1} parent=0 // pred_fallthru
    _
  // Predicated region
  $region10: #{ttt_model_forward.1} parent=0 // pred_check
    _
  $region11: #{ttt_model_forward.1} parent=0 // pred_check_branch
    %19 = sbr.rel (0) target = $region13
  $region12: #{ttt_model_forward.1} parent=0 // pred_region
    _
  $region13: #{ttt_model_forward.1} parent=0 // pred_fallthru
    _
  // Predicated region
  $region14: #{ttt_model_forward.1} parent=0 // pred_check
    _
  $region15: #{ttt_model_forward.1} parent=0 // pred_check_branch
    %21 = sbr.rel (0) target = $region17
  $region16: #{ttt_model_forward.1} parent=0 // pred_region
    _
  $region17: #{ttt_model_forward.1} parent=0 // pred_fallthru
    _
  // Predicated region
  $region18: #{ttt_model_forward.1} parent=0 // pred_check
    _
  $region19: #{ttt_model_forward.1} parent=0 // pred_check_branch
    %23 = sbr.rel (0) target = $region21
  $region20: #{ttt_model_forward.1} parent=0 // pred_region
    _
  $region21: #{ttt_model_forward.1} parent=0 // pred_fallthru
    _
  // Predicated region
  $region22: #{ttt_model_forward.1} parent=0 // pred_check
    _
  $region23: #{ttt_model_forward.1} parent=0 // pred_check_branch
    %25 = sbr.rel (0) target = $region25
  $region24: #{ttt_model_forward.1} parent=0 // pred_region
    _
  $region25: #{ttt_model_forward.1} parent=0 // pred_fallthru
    _
  // Predicated region
  $region26: #{ttt_model_forward.1} parent=0 // pred_check
    _
  $region27: #{ttt_model_forward.1} parent=0 // pred_check_branch
    %27 = sbr.rel (0) target = $region29
  $region28: #{ttt_model_forward.1} parent=0 // pred_region
    _
  $region29: #{ttt_model_forward.1} parent=0 // pred_fallthru
    _
  // Predicated region
  $region30: #{ttt_model_forward.1} parent=0 // pred_check
    _
  $region31: #{ttt_model_forward.1} parent=0 // pred_check_branch
    %29 = sbr.rel (0) target = $region33
  $region32: #{ttt_model_forward.1} parent=0 // pred_region
    _
  $region33: #{ttt_model_forward.1} parent=0 // pred_fallthru
    _
  // Predicated region
  $region34: #{ttt_model_forward.1} parent=0 // pred_check
    _
  $region35: #{ttt_model_forward.1} parent=0 // pred_check_branch
    %31 = sbr.rel (0) target = $region37
  $region36: #{ttt_model_forward.1} parent=0 // pred_region
    _
  $region37: #{ttt_model_forward.1} parent=0 // pred_fallthru
    _
  %v32 = vld [vmem:[%s1] sm:$0xff]
  %v33 = vld [vmem:[%s1 + $0x8] sm:$0xff]
  %v34 = vld [vmem:[%s2] sm:$0xff]
  %v35 = vld [vmem:[%s2 + $0x8] sm:$0xff]
  %v36 = vld [vmem:[%s3] sm:$0xff]
  %v37 = vld [vmem:[%s3 + $0x8] sm:$0xff]
  %v38 = vld [vmem:[%s3 + $0x10] sm:$0xff]
  %v39 = vld [vmem:[%s3 + $0x18] sm:$0xff]
  %v40 = vld [vmem:[%s4] sm:$0xff]
  %v41 = vld [vmem:[%s4 + $0x8] sm:$0xff]
  %v42 = vld [vmem:[%s4 + $0x10] sm:$0xff]
  %v43 = vld [vmem:[%s4 + $0x18] sm:$0xff]
  %v44 = vld [vmem:[%s5] sm:$0xff]
  %v45 = vld [vmem:[%s5 + $0x8] sm:$0xff]
  %v46 = vld [vmem:[%s6] sm:$0xff]
  %v47 = vld [vmem:[%s6 + $0x8] sm:$0xff]
  %v48 = vld [vmem:[%s7] sm:$0xff]
  %v49 = vld [vmem:[%s7 + $0x8] sm:$0xff]
  %v50 = vld [vmem:[%s8] sm:$0xff]
  %v51 = vld [vmem:[%s8 + $0x8] sm:$0xff]
  %v52 = vld [vmem:[%s0] sm:$0xff]
  %v53 = vld [vmem:[%s0 + $0x8] sm:$0xff]
  %55 = vset.pattern.permute.xlu0 0
  %56 = vperm.xlu0 %55, %v34
  %v57 = vpop.permute.xlu0 %56
  %60 = vset.pattern.permute.xlu0 0
  %61 = vperm.xlu0 %60, %v35
  %v62 = vpop.permute.xlu0 %61
  %vm64 = vcmask 130048
  %v66 = vsel %vm64, %v32, 0
  %v69 = vsel %vm64, %v33, 0
  %71 = vmatpush.msra.mxu0 0.0
  %72 = vmatpush.msra.mxu0 0.0
  %73 = vmatpush.msra.mxu0 0.0
  %74 = vmatpush.msra.mxu0 0.0
  %75 = vmatpush.msra.mxu0 0.0
  %76 = vmatpush.msra.mxu0 0.0
  %77 = vmatpush.msra.mxu0 0.0
  %78 = vmatpush.msra.mxu0 0.0
  %79 = vmatpush.msra.mxu0 0.0
  %80 = vmatpush.msra.mxu0 0.0
  %81 = vmatpush.msra.mxu0 0.0
  %82 = vmatpush.msra.mxu0 0.0
  %83 = vmatpush.msra.mxu0 0.0
  %84 = vmatpush.msra.mxu0 0.0
  %85 = vmatpush.msra.mxu0 %v53
  %86 = vmatpush.msra.mxu0 %v52
  %87 = vmatmul.f32.gmra.mxu0 %v66
  %v88 = vpop.f32.mrf.mxu0
  %v89 = vadd.f32 %v57, %v88
  %90 = vmatmul.f32.gmra.mxu0 %v69
  %v91 = vpop.f32.mrf.mxu0
  %v92 = vadd.f32 %v62, %v91
  %93 = vdwg.mxu0
  %v94 = vmax.f32 %v89, 0.0
  %v95 = vmax.f32 %v92, 0.0
  %97 = vset.pattern.permute.xlu0 0
  %98 = vperm.xlu0 %97, %v40
  %v99 = vpop.permute.xlu0 %98
  %102 = vset.pattern.permute.xlu0 0
  %103 = vperm.xlu0 %102, %v41
  %v104 = vpop.permute.xlu0 %103
  %107 = vset.pattern.permute.xlu0 0
  %108 = vperm.xlu0 %107, %v42
  %v109 = vpop.permute.xlu0 %108
  %112 = vset.pattern.permute.xlu0 0
  %113 = vperm.xlu0 %112, %v43
  %v114 = vpop.permute.xlu0 %113
  %v117 = vsel %vm64, %v36, 0
  %v120 = vsel %vm64, %v37, 0
  %v123 = vsel %vm64, %v38, 0
  %v126 = vsel %vm64, %v39, 0
  %128 = vmatpush.msra.mxu0 0.0
  %129 = vmatpush.msra.mxu0 0.0
  %130 = vmatpush.msra.mxu0 0.0
  %131 = vmatpush.msra.mxu0 0.0
  %132 = vmatpush.msra.mxu0 0.0
  %133 = vmatpush.msra.mxu0 0.0
  %134 = vmatpush.msra.mxu0 0.0
  %135 = vmatpush.msra.mxu0 0.0
  %136 = vmatpush.msra.mxu0 0.0
  %137 = vmatpush.msra.mxu0 0.0
  %138 = vmatpush.msra.mxu0 0.0
  %139 = vmatpush.msra.mxu0 0.0
  %140 = vmatpush.msra.mxu0 0.0
  %141 = vmatpush.msra.mxu0 0.0
  %142 = vmatpush.msra.mxu0 %v95
  %143 = vmatpush.msra.mxu0 %v94
  %144 = vmatmul.f32.gmra.mxu0 %v117
  %v145 = vpop.f32.mrf.mxu0
  %v146 = vadd.f32 %v99, %v145
  %147 = vmatmul.f32.gmra.mxu0 %v120
  %v148 = vpop.f32.mrf.mxu0
  %v149 = vadd.f32 %v104, %v148
  %150 = vmatmul.f32.gmra.mxu0 %v123
  %v151 = vpop.f32.mrf.mxu0
  %v152 = vadd.f32 %v109, %v151
  %153 = vmatmul.f32.gmra.mxu0 %v126
  %v154 = vpop.f32.mrf.mxu0
  %v155 = vadd.f32 %v114, %v154
  %156 = vdwg.mxu0
  %v157 = vmax.f32 %v146, 0.0
  %v158 = vmax.f32 %v149, 0.0
  %v159 = vmax.f32 %v152, 0.0
  %v160 = vmax.f32 %v155, 0.0
  %162 = vset.pattern.permute.xlu0 0
  %163 = vperm.xlu0 %162, %v46
  %v164 = vpop.permute.xlu0 %163
  %167 = vset.pattern.permute.xlu0 0
  %168 = vperm.xlu0 %167, %v47
  %v169 = vpop.permute.xlu0 %168
  %vm171 = vcmask 261120
  %v173 = vsel %vm171, %v44, 0
  %v176 = vsel %vm171, %v45, 0
  %178 = vmatpush.msra.mxu0 0.0
  %179 = vmatpush.msra.mxu0 0.0
  %180 = vmatpush.msra.mxu0 0.0
  %181 = vmatpush.msra.mxu0 0.0
  %182 = vmatpush.msra.mxu0 0.0
  %183 = vmatpush.msra.mxu0 0.0
  %184 = vmatpush.msra.mxu0 0.0
  %185 = vmatpush.msra.mxu0 0.0
  %186 = vmatpush.msra.mxu0 0.0
  %187 = vmatpush.msra.mxu0 0.0
  %188 = vmatpush.msra.mxu0 0.0
  %189 = vmatpush.msra.mxu0 0.0
  %190 = vmatpush.msra.mxu0 %v160
  %191 = vmatpush.msra.mxu0 %v159
  %192 = vmatpush.msra.mxu0 %v158
  %193 = vmatpush.msra.mxu0 %v157
  %194 = vmatmul.f32.gmra.mxu0 %v173
  %v195 = vpop.f32.mrf.mxu0
  %v196 = vadd.f32 %v164, %v195
  %197 = vmatmul.f32.gmra.mxu0 %v176
  %v198 = vpop.f32.mrf.mxu0
  %v199 = vadd.f32 %v169, %v198
  %200 = vdwg.mxu0
  %v201 = vmax.f32 %v196, 0.0
  %v202 = vmax.f32 %v199, 0.0
  %204 = vset.pattern.permute.xlu0 0
  %205 = vperm.xlu0 %204, %v50
  %v206 = vpop.permute.xlu0 %205
  %209 = vset.pattern.permute.xlu0 0
  %210 = vperm.xlu0 %209, %v51
  %v211 = vpop.permute.xlu0 %210
  %v214 = vsel %vm64, %v48, 0
  %v217 = vsel %vm64, %v49, 0
  %219 = vmatpush.msra.mxu0 0.0
  %220 = vmatpush.msra.mxu0 0.0
  %221 = vmatpush.msra.mxu0 0.0
  %222 = vmatpush.msra.mxu0 0.0
  %223 = vmatpush.msra.mxu0 0.0
  %224 = vmatpush.msra.mxu0 0.0
  %225 = vmatpush.msra.mxu0 0.0
  %226 = vmatpush.msra.mxu0 0.0
  %227 = vmatpush.msra.mxu0 0.0
  %228 = vmatpush.msra.mxu0 0.0
  %229 = vmatpush.msra.mxu0 0.0
  %230 = vmatpush.msra.mxu0 0.0
  %231 = vmatpush.msra.mxu0 0.0
  %232 = vmatpush.msra.mxu0 0.0
  %233 = vmatpush.msra.mxu0 %v202
  %234 = vmatpush.msra.mxu0 %v201
  %235 = vmatmul.f32.gmra.mxu0 %v214
  %v236 = vpop.f32.mrf.mxu0
  %v237 = vadd.f32 %v206, %v236
  %238 = vmatmul.f32.gmra.mxu0 %v217
  %v239 = vpop.f32.mrf.mxu0
  %v240 = vadd.f32 %v211, %v239
  %241 = vdwg.mxu0
  %242 = vst [vmem:[%s9] sm:$0xff] %v237
  %243 = vst [vmem:[%s9 + $0x8] sm:$0xff] %v240
  // Predicated region
  $region38: #{ttt_model_forward.1} parent=0 // pred_check
    _
  $region39: #{ttt_model_forward.1} parent=0 // pred_check_branch
    %245 = sbr.rel (0) target = $region41
  $region40: #{ttt_model_forward.1} parent=0 // pred_region
    _
  $region41: #{ttt_model_forward.1} parent=0 // pred_fallthru
    _
  // Predicated region
  $region42: #{ttt_model_forward.1} parent=0 // pred_check
    _
  $region43: #{ttt_model_forward.1} parent=0 // pred_check_branch
    %247 = sbr.rel (0) target = $region45
  $region44: #{ttt_model_forward.1} parent=0 // pred_region
    _
  $region45: #{ttt_model_forward.1} parent=0 // pred_fallthru
    _

</llo_original>
